<compile_context>
chip_gen: v7x
topology: tpu7x:2x2x1
jax: 0.10.0
libtpu: 0.0.40
codegen_flags: <defaults>
</compile_context>

<pallas_src>
import functools
from typing import NamedTuple

import jax
import jax.numpy as jnp
from jax.experimental import pallas as pl
from jax.experimental.pallas import tpu as pltpu

LANE = 128        # TPU lane width (last dim of a vreg)
SUBLANE_F32 = 8   # f32 sublane packing
SUBLANE_BF16 = 16 # bf16 sublane packing


def _round_up(x, m):
    return (x + m - 1) // m * m


# --------------------------------------------------------------------------- #
# Parameter preparation (done ONCE, reused across forward calls)
# --------------------------------------------------------------------------- #
class PreparedParams(NamedTuple):
    padded: tuple      # ((W0p, b0p), (W1p, b1p), ...) W in mxu_dtype, b in f32
    pdims: tuple       # padded feature dims; pdims[0] == D0 (kept un-padded)
    out_dim: int       # real number of classes
    mxu_dtype: object  # canonical dtype fed to the MXU


def prepare_params(params, mxu_dtype=jnp.bfloat16):
    """Pad hidden/output feature dims to the 128-lane width and cast weights to
    the MXU dtype.  Call once and reuse (removes per-call pad/convert ops)."""
    mxu_dtype = jnp.dtype(mxu_dtype)
    d0 = int(params[0][0].shape[0])
    dims = [d0] + [int(w.shape[1]) for (w, _) in params]
    pdims = [d0] + [_round_up(d, LANE) for d in dims[1:]]   # X's D0 stays un-padded
    out_dim = dims[-1]

    padded = []
    for i, (w, b) in enumerate(params):
        w = jnp.asarray(w, jnp.float32)
        b = jnp.asarray(b, jnp.float32)
        wp = jnp.zeros((pdims[i], pdims[i + 1]), mxu_dtype)
        wp = wp.at[: w.shape[0], : w.shape[1]].set(w.astype(mxu_dtype))
        bp = jnp.zeros((1, pdims[i + 1]), jnp.float32)
        bp = bp.at[0, : b.shape[0]].set(b)
        padded.append((wp, bp))
    return PreparedParams(tuple(padded), tuple(pdims), out_dim, mxu_dtype)


# --------------------------------------------------------------------------- #
# Kernel
# --------------------------------------------------------------------------- #
def _mlp_kernel(*refs, num_layers, out_dim, mxu_dtype):
    # refs = (x_ref, W0, b0, W1, b1, ..., W_{L-1}, b_{L-1}, out_ref)
    x_ref = refs[0]
    out_ref = refs[-1]
    param_refs = refs[1:-1]

    h = x_ref[...]                                    # bf16 path: already mxu_dtype
    for i in range(num_layers):
        w_ref = param_refs[2 * i]                     # [D_in(_pad), D_out_pad], mxu_dtype
        b_ref = param_refs[2 * i + 1]                 # [1, D_out_pad], f32
        lhs = h if h.dtype == mxu_dtype else h.astype(mxu_dtype)  # cast only at MXU boundary
        h = jnp.dot(lhs, w_ref[...], preferred_element_type=jnp.float32) + b_ref[...]
        if i < num_layers - 1:
            h = jnp.maximum(h, 0.0)                   # nn.ReLU (f32, VPU)

    # softmax over the real classes only (padded lanes carry zero logits from
    # the zero-padded weights/biases -> mask them out before max/exp/sum).
    if h.shape[-1] != out_dim:
        col = jax.lax.broadcasted_iota(jnp.int32, h.shape, dimension=1)
        h = jnp.where(col < out_dim, h, -1e30)
    m = jnp.max(h, axis=-1, keepdims=True)
    e = jnp.exp(h - m)
    s = jnp.sum(e, axis=-1, keepdims=True)
    out_ref[...] = (e / s).astype(out_ref.dtype)      # exact divide: rows sum to 1


# --------------------------------------------------------------------------- #
# Wrapper
# --------------------------------------------------------------------------- #
def _vmem_cap_budget():
    """Per-generation VMEM cap with headroom for Mosaic internal scratch."""
    try:
        cap = int(pltpu.get_tpu_info().vmem_capacity_bytes)
    except Exception:
        cap = 64 * 2**20                      # conservative (v7x-sized) fallback
    return max(16 * 2**20, int(cap * 0.8))    # ~51 MiB on v7x, ~102 MiB on v5e/v6e


def _default_batch_tile(n, m_gran):
    """Fill the MXU M dimension (up to 512 rows) while keeping >= 4 grid steps
    (>= 2 per TensorCore on v7x) once the batch is large enough."""
    if n >= 4 * 512:
        return 512
    if n >= 4 * 128:
        return _round_up(pl.cdiv(n, 4), 128)
    return max(m_gran, _round_up(pl.cdiv(n, 4), m_gran))   # tiny batch


def pt_deep_forward(x, params, *, batch_tile=None, mxu_dtype=jnp.bfloat16,
                    out_dtype=jnp.float32):
    """Forward pass of PTDeep: softmax(ReLU(...ReLU(x@W0+b0)...)@W_L + b_L, dim=1).

    x:        [N, D0]
    params:   list of (W_i [D_i, D_{i+1}], b_i [D_{i+1}]) tuples, or a
              PreparedParams from prepare_params() (pad + cast done once).
    mxu_dtype: MXU operand dtype.  bfloat16 (default) with f32 accumulation is
              the right choice on v5e/v6e/v7x; float32 operands are emulated
              with multiple bf16 passes (~3-6x slower MXU, 2x weight DMA) and
              only worth it when f32 parity with PyTorch is required.
    out_dtype: output dtype; bf16 halves the HBM writeback of the padded
              probability tile (biggest win on v5e), f32 keeps exact outputs.
    Returns [N, num_classes] probabilities (rows sum to 1).
    """
    if isinstance(params, PreparedParams):
        prep = params
        mxu_dtype = prep.mxu_dtype
    else:
        mxu_dtype = jnp.dtype(mxu_dtype)
        prep = prepare_params(params, mxu_dtype=mxu_dtype)
    padded_params, pdims, out_dim = prep.padded, prep.pdims, prep.out_dim
    num_layers = len(padded_params)
    d0, out_p = pdims[0], pdims[-1]

    is_bf16 = mxu_dtype == jnp.dtype(jnp.bfloat16)
    x_dtype = mxu_dtype if is_bf16 else jnp.dtype(jnp.float32)
    x = jnp.asarray(x).astype(x_dtype)              # bf16 path: half the x DMA
    n = x.shape[0]
    assert x.shape[1] == d0, "input feature dim must match W0 rows"

    # ---- batch tiling -------------------------------------------------------
    m_gran = SUBLANE_BF16 if is_bf16 else SUBLANE_F32
    if batch_tile is None:
        batch_tile = _default_batch_tile(n, m_gran)
    batch_tile = max(m_gran, _round_up(int(batch_tile), m_gran))
    n_pad = _round_up(n, batch_tile)
    if n_pad != n:
        x = jnp.zeros((n_pad, d0), x_dtype).at[:n].set(x)
    grid = (n_pad // batch_tile,)

    # ---- specs --------------------------------------------------------------
    flat_inputs = [x]
    in_specs = [pl.BlockSpec((batch_tile, d0), lambda i: (i, 0))]
    for (wp, bp) in padded_params:
        flat_inputs.append(wp)
        in_specs.append(pl.BlockSpec(wp.shape, lambda i: (0, 0)))   # grid-invariant
        flat_inputs.append(bp)
        in_specs.append(pl.BlockSpec(bp.shape, lambda i: (0, 0)))   # grid-invariant
    out_specs = pl.BlockSpec((batch_tile, out_p), lambda i: (i, 0))  # lane-dense

    # ---- VMEM budget --------------------------------------------------------
    x_bytes = batch_tile * d0 * jnp.dtype(x_dtype).itemsize
    out_bytes = batch_tile * out_p * jnp.dtype(out_dtype).itemsize
    param_bytes = sum(int(w.size) * w.dtype.itemsize + int(b.size) * 4
                      for (w, b) in padded_params)
    act_bytes = 3 * batch_tile * max(pdims) * 4          # live f32 temporaries
    # Streamed tiles (x, out) are double-buffered; grid-invariant params are
    # fetched once -> count them once, plus fixed headroom for Mosaic scratch.
    vmem_needed = 2 * (x_bytes + out_bytes) + param_bytes + act_bytes
    vmem_limit = int(min(_vmem_cap_budget(), max(vmem_needed + (8 << 20), 16 << 20)))
    # TODO(synk): weight-streaming fallback (second grid axis over output
    # features, or pltpu.emit_pipeline over K/N weight tiles) when param_bytes
    # exceeds ~half the per-generation VMEM budget; weights are kept fully
    # resident here, which OOMs first on v7x's 64 MiB VMEM.

    kernel = functools.partial(_mlp_kernel, num_layers=num_layers,
                               out_dim=out_dim, mxu_dtype=mxu_dtype)

    out_padded = pl.pallas_call(
        kernel,
        out_shape=jax.ShapeDtypeStruct((n_pad, out_p), out_dtype),
        grid_spec=pltpu.PrefetchScalarGridSpec(
            num_scalar_prefetch=0,
            grid=grid,
            in_specs=in_specs,
            out_specs=out_specs,
        ),
        compiler_params=pltpu.CompilerParams(
            dimension_semantics=("parallel",),
            vmem_limit_bytes=vmem_limit,
        ),
    )(*flat_inputs)

    return out_padded[:n, :out_dim]


# --------------------------------------------------------------------------- #
# Reference / init helpers
# --------------------------------------------------------------------------- #
def init_params(layers, key):
    """Deterministic init mirroring PTDeep.__init__: W ~ N(0,1), b = 0."""
    params = []
    for (in_dim, out_dim) in zip(layers, layers[1:]):
        key, sub = jax.random.split(key)
        w = jax.random.normal(sub, (in_dim, out_dim), dtype=jnp.float32)
        b = jnp.zeros((out_dim,), dtype=jnp.float32)
        params.append((w, b))
    return params


def pt_deep_forward_ref(x, params, mxu_dtype=None):
    """Pure-JAX reference. mxu_dtype=None -> exact PyTorch-f32 semantics;
    mxu_dtype=jnp.bfloat16 -> same precision boundaries as the bf16 kernel."""
    h = jnp.asarray(x, jnp.float32)
    for i, (w, b) in enumerate(params):
        w = jnp.asarray(w, jnp.float32)
        if mxu_dtype is None:
            h = h @ w + b
        else:
            h = jnp.dot(h.astype(mxu_dtype), w.astype(mxu_dtype),
                        preferred_element_type=jnp.float32) + b
        if i < len(params) - 1:
            h = jnp.maximum(h, 0.0)
    return jax.nn.softmax(h, axis=1)


# --------------------------------------------------------------------------- #
# Demo
# --------------------------------------------------------------------------- #
if __name__ == "__main__":
    key = jax.random.PRNGKey(0)
    # layers = [input_dim, hidden, hidden, num_classes]
    layers = [4, 32, 32, 10]
    batch = 64

    kp, kx = jax.random.split(key)
    params = init_params(layers, kp)
    x = jax.random.normal(kx, (batch, layers[0]), dtype=jnp.float32)

    # Default path: weights padded/cast ONCE, bf16 MXU operands, f32 accumulate.
    prep_bf16 = prepare_params(params, mxu_dtype=jnp.bfloat16)
    out = jax.block_until_ready(pt_deep_forward(x, prep_bf16))
    ref_bf16 = pt_deep_forward_ref(x, params, mxu_dtype=jnp.bfloat16)
    assert out.shape == (batch, layers[-1])
    assert jnp.allclose(out, ref_bf16, atol=1e-2, rtol=1e-2), "mismatch vs bf16 reference"
    assert jnp.allclose(jnp.sum(out, axis=1), 1.0, atol=1e-3), "rows must sum to 1"

    # f32 MXU path: matches the PyTorch float32 forward (slower on the MXU).
    out_f32 = jax.block_until_ready(
        pt_deep_forward(x, params, mxu_dtype=jnp.float32))
    ref_f32 = pt_deep_forward_ref(x, params)
    assert jnp.allclose(out_f32, ref_f32, atol=2e-3, rtol=2e-3), "mismatch vs f32 reference"
    assert jnp.allclose(jnp.sum(out_f32, axis=1), 1.0, atol=1e-3), "rows must sum to 1"

    print("KERNEL_OK")
</pallas_src>

<mosaic_0001>
module attributes {stable_mosaic.version = 11 : i64} {
  func.func @_mlp_kernel(%arg0: i32, %arg1: memref<16x4xbf16, #tpu.memory_space<vmem>>, %arg2: memref<4x128xbf16, #tpu.memory_space<vmem>>, %arg3: memref<1x128xf32, #tpu.memory_space<vmem>>, %arg4: memref<128x128xbf16, #tpu.memory_space<vmem>>, %arg5: memref<1x128xf32, #tpu.memory_space<vmem>>, %arg6: memref<128x128xbf16, #tpu.memory_space<vmem>>, %arg7: memref<1x128xf32, #tpu.memory_space<vmem>>, %arg8: memref<16x128xf32, #tpu.memory_space<vmem>>) attributes {dimension_semantics = [#tpu.dimension_semantics<parallel>], iteration_bounds = array<i64: 4>, scalar_prefetch = 0 : i64, scratch_operands = 0 : i64, tpu.core_type = #tpu.core_type<tc>, window_params = [{transform_indices = @transform_0, window_bounds = array<i64: 16, 4>}, {pipeline_mode = #tpu.pipeline_mode<synchronous>, transform_indices = @transform_1, window_bounds = array<i64: 4, 128>}, {pipeline_mode = #tpu.pipeline_mode<synchronous>, transform_indices = @transform_2, window_bounds = array<i64: 1, 128>}, {pipeline_mode = #tpu.pipeline_mode<synchronous>, transform_indices = @transform_3, window_bounds = array<i64: 128, 128>}, {pipeline_mode = #tpu.pipeline_mode<synchronous>, transform_indices = @transform_4, window_bounds = array<i64: 1, 128>}, {pipeline_mode = #tpu.pipeline_mode<synchronous>, transform_indices = @transform_5, window_bounds = array<i64: 128, 128>}, {pipeline_mode = #tpu.pipeline_mode<synchronous>, transform_indices = @transform_6, window_bounds = array<i64: 1, 128>}, {transform_indices = @transform_7, window_bounds = array<i64: 16, 128>}]} {
    %c0 = arith.constant 0 : index
    %c0_0 = arith.constant 0 : index
    %0 = vector.load %arg1[%c0, %c0_0] : memref<16x4xbf16, #tpu.memory_space<vmem>>, vector<16x4xbf16>
    %c0_1 = arith.constant 0 : index
    %c0_2 = arith.constant 0 : index
    %1 = vector.load %arg2[%c0_1, %c0_2] : memref<4x128xbf16, #tpu.memory_space<vmem>>, vector<4x128xbf16>
    %cst = arith.constant dense<0.000000e+00> : vector<16x128xf32>
    %2 = tpu.matmul %0, %1, %cst {dimension_numbers = #tpu.dot_dimension_numbers<[1], [0], [0], [1], [0, 0, 1, 1], [], []>} : vector<16x4xbf16>, vector<4x128xbf16>, vector<16x128xf32> -> vector<16x128xf32>
    %c0_3 = arith.constant 0 : index
    %c0_4 = arith.constant 0 : index
    %3 = vector.load %arg3[%c0_3, %c0_4] : memref<1x128xf32, #tpu.memory_space<vmem>>, vector<1x128xf32>
    %4 = vector.broadcast %3 : vector<1x128xf32> to vector<16x128xf32>
    %5 = arith.addf %2, %4 : vector<16x128xf32>
    %cst_5 = arith.constant 0.000000e+00 : f32
    %6 = vector.broadcast %cst_5 : f32 to vector<16x128xf32>
    %7 = arith.maximumf %5, %6 : vector<16x128xf32>
    %8 = arith.truncf %7 : vector<16x128xf32> to vector<16x128xbf16>
    %c0_6 = arith.constant 0 : index
    %c0_7 = arith.constant 0 : index
    %9 = vector.load %arg4[%c0_6, %c0_7] : memref<128x128xbf16, #tpu.memory_space<vmem>>, vector<128x128xbf16>
    %cst_8 = arith.constant dense<0.000000e+00> : vector<16x128xf32>
    %10 = tpu.matmul %8, %9, %cst_8 {dimension_numbers = #tpu.dot_dimension_numbers<[1], [0], [0], [1], [0, 0, 1, 1], [], []>} : vector<16x128xbf16>, vector<128x128xbf16>, vector<16x128xf32> -> vector<16x128xf32>
    %c0_9 = arith.constant 0 : index
    %c0_10 = arith.constant 0 : index
    %11 = vector.load %arg5[%c0_9, %c0_10] : memref<1x128xf32, #tpu.memory_space<vmem>>, vector<1x128xf32>
    %12 = vector.broadcast %11 : vector<1x128xf32> to vector<16x128xf32>
    %13 = arith.addf %10, %12 : vector<16x128xf32>
    %cst_11 = arith.constant 0.000000e+00 : f32
    %14 = vector.broadcast %cst_11 : f32 to vector<16x128xf32>
    %15 = arith.maximumf %13, %14 : vector<16x128xf32>
    %16 = arith.truncf %15 : vector<16x128xf32> to vector<16x128xbf16>
    %c0_12 = arith.constant 0 : index
    %c0_13 = arith.constant 0 : index
    %17 = vector.load %arg6[%c0_12, %c0_13] : memref<128x128xbf16, #tpu.memory_space<vmem>>, vector<128x128xbf16>
    %cst_14 = arith.constant dense<0.000000e+00> : vector<16x128xf32>
    %18 = tpu.matmul %16, %17, %cst_14 {dimension_numbers = #tpu.dot_dimension_numbers<[1], [0], [0], [1], [0, 0, 1, 1], [], []>} : vector<16x128xbf16>, vector<128x128xbf16>, vector<16x128xf32> -> vector<16x128xf32>
    %c0_15 = arith.constant 0 : index
    %c0_16 = arith.constant 0 : index
    %19 = vector.load %arg7[%c0_15, %c0_16] : memref<1x128xf32, #tpu.memory_space<vmem>>, vector<1x128xf32>
    %20 = vector.broadcast %19 : vector<1x128xf32> to vector<16x128xf32>
    %21 = arith.addf %18, %20 : vector<16x128xf32>
    %22 = tpu.iota {dimensions = array<i32: 1>} : vector<16x128xi32>
    %c10_i32 = arith.constant 10 : i32
    %23 = vector.broadcast %c10_i32 : i32 to vector<16x128xi32>
    %24 = arith.cmpi slt, %22, %23 : vector<16x128xi32>
    %cst_17 = arith.constant -1.000000e+30 : f32
    %25 = vector.broadcast %cst_17 : f32 to vector<16x128xf32>
    %26 = arith.select %24, %21, %25 : vector<16x128xi1>, vector<16x128xf32>
    %cst_18 = arith.constant dense<0xFF800000> : vector<16xf32>
    %27 = vector.multi_reduction <maximumf>, %26, %cst_18 [1] : vector<16x128xf32> to vector<16xf32>
    %28 = vector.shape_cast %27 : vector<16xf32> to vector<16x1xf32>
    %29 = vector.broadcast %28 : vector<16x1xf32> to vector<16x128xf32>
    %30 = arith.subf %26, %29 : vector<16x128xf32>
    %31 = math.exp %30 : vector<16x128xf32>
    %cst_19 = arith.constant dense<0.000000e+00> : vector<16xf32>
    %32 = vector.multi_reduction <add>, %31, %cst_19 [1] : vector<16x128xf32> to vector<16xf32>
    %33 = vector.shape_cast %32 : vector<16xf32> to vector<16x1xf32>
    %34 = vector.broadcast %33 : vector<16x1xf32> to vector<16x128xf32>
    %35 = arith.divf %31, %34 : vector<16x128xf32>
    %c0_20 = arith.constant 0 : index
    %c0_21 = arith.constant 0 : index
    %36 = vector.load %arg8[%c0_20, %c0_21] : memref<16x128xf32, #tpu.memory_space<vmem>>, vector<16x128xf32>
    tpu.vector_store %arg8[%c0_20, %c0_21], %35 {strides = array<i32>} : memref<16x128xf32, #tpu.memory_space<vmem>>, vector<16x128xf32>,
    return
  }
  func.func @transform_0(%arg0: i32) -> (i32, i32) {
    %c0_i32 = arith.constant 0 : i32
    %c0_i32_0 = arith.constant 0 : i32
    return %arg0, %c0_i32 : i32, i32
  }
  func.func @transform_1(%arg0: i32) -> (i32, i32) {
    %c0_i32 = arith.constant 0 : i32
    %c0_i32_0 = arith.constant 0 : i32
    %c0_i32_1 = arith.constant 0 : i32
    return %c0_i32, %c0_i32_0 : i32, i32
  }
  func.func @transform_2(%arg0: i32) -> (i32, i32) {
    %c0_i32 = arith.constant 0 : i32
    %c0_i32_0 = arith.constant 0 : i32
    %c0_i32_1 = arith.constant 0 : i32
    return %c0_i32, %c0_i32_0 : i32, i32
  }
  func.func @transform_3(%arg0: i32) -> (i32, i32) {
    %c0_i32 = arith.constant 0 : i32
    %c0_i32_0 = arith.constant 0 : i32
    %c0_i32_1 = arith.constant 0 : i32
    return %c0_i32, %c0_i32_0 : i32, i32
  }
  func.func @transform_4(%arg0: i32) -> (i32, i32) {
    %c0_i32 = arith.constant 0 : i32
    %c0_i32_0 = arith.constant 0 : i32
    %c0_i32_1 = arith.constant 0 : i32
    return %c0_i32, %c0_i32_0 : i32, i32
  }
  func.func @transform_5(%arg0: i32) -> (i32, i32) {
    %c0_i32 = arith.constant 0 : i32
    %c0_i32_0 = arith.constant 0 : i32
    %c0_i32_1 = arith.constant 0 : i32
    return %c0_i32, %c0_i32_0 : i32, i32
  }
  func.func @transform_6(%arg0: i32) -> (i32, i32) {
    %c0_i32 = arith.constant 0 : i32
    %c0_i32_0 = arith.constant 0 : i32
    %c0_i32_1 = arith.constant 0 : i32
    return %c0_i32, %c0_i32_0 : i32, i32
  }
  func.func @transform_7(%arg0: i32) -> (i32, i32) {
    %c0_i32 = arith.constant 0 : i32
    %c0_i32_0 = arith.constant 0 : i32
    return %arg0, %c0_i32 : i32, i32
  }
}

</mosaic_0001>

<llo_original>
// kernel: tpu_custom_call.1
$region0: #{tpu_custom_call.1}
  #allocation0 [shape = 'u32[]', space=smem, size = 0x4, offset = 0x4, fixed_abs, tag = 'smem constant byte address 0x4 - core index']
  #allocation1 [shape = 'u32[144,128]{1,0:T(1,128)}', space=vmem, size = 0x12000, scoped, tag = 'internal scratch']
  %s0 = inlined_call_operand.vmem [shape: bf16[64,4], index: 0, kind: input, shape index: {}]
  %s1 = inlined_call_operand.vmem [shape: bf16[4,128], index: 1, kind: input, shape index: {}]
  %s2 = inlined_call_operand.vmem [shape: f32[1,128], index: 2, kind: input, shape index: {}]
  %s3 = inlined_call_operand.hbm [shape: bf16[128,128], index: 3, kind: input, shape index: {}]
  %s4 = inlined_call_operand.vmem [shape: f32[1,128], index: 4, kind: input, shape index: {}]
  %s5 = inlined_call_operand.hbm [shape: bf16[128,128], index: 5, kind: input, shape index: {}]
  %s6 = inlined_call_operand.vmem [shape: f32[1,128], index: 6, kind: input, shape index: {}]
  %s7 = inlined_call_operand.hbm [shape: f32[64,128], index: 7, kind: output, shape index: {}]
  %s8 = sld [smem:[#allocation0]]
  $region69: #{tpu_custom_call.1} parent=0
    _
  %s10 = ssub.s32 1, %s8
  %s11 = scalar_select 0, %s10, %s8
  $region1: #{tpu_custom_call.1} parent=0
    #allocation2 [shape = 'u8[32768]{0}', space=vmem, size = 0x8000, scoped, tag = 'input window, operand 3, single buffered']
    #allocation3 [shape = 's32[2]{0}', space=sflag, size = 0x8, scoped, tag = 'scoped memory for tpu_custom_call.1']
    #allocation4 [shape = 's32[2]{0}', space=sflag, size = 0x8, scoped, tag = 'scoped memory for tpu_custom_call.1']
    #allocation5 [shape = 'u8[32768]{0}', space=vmem, size = 0x8000, scoped, tag = 'input window, operand 5, single buffered']
    #allocation6 [shape = 's32[1]{0}', space=sflag, size = 0x4, scoped, tag = 'scoped memory for tpu_custom_call.1']
    #allocation7 [shape = 'u8[16384]{0}', space=vmem, size = 0x4000, scoped, tag = 'output window, operand 0']
    %12 = vsyncpa [#allocation3], 0
    %13 = vsyncpa [#allocation6], 0
    %14 = vsyncpa [#allocation4], 0
    %s15 = scalar_lea.sflag [#allocation4], 1
    %16 = vsyncpa %s15, 0
    loop: start=0, step=1, limit=6
    $region2: #{tpu_custom_call.1} parent=1 // loop_pre_header
      _
    $region3: #{tpu_custom_call.1} parent=1 // loop_header
      %s18 = sphi 0, %s22
      %p19 = scmp.ge.s32.totalorder %s18, 6
      %s28 = sphi 0, %s30
      %s31 = sphi 0, %s28
      %s32 = sphi 0, %s31
      %s48 = sphi 0, %s32
      %s52 = sphi 0, %s52
      %s54 = sphi 0, %s52
      %s55 = sphi 0, %s54
      %s69 = sphi 0, %s55
      %s73 = sphi 0, %s73
      %s75 = sphi 0, %s73
      %s76 = sphi 0, %s75
      %s90 = sphi 0, %s76
      %s94 = sphi 0, %s94
      %s96 = sphi 0, %s94
      %s97 = sphi 0, %s96
      %s111 = sphi 0, %s97
      %s115 = sphi 0, %s115
      %s117 = sphi 0, %s115
      %s118 = sphi 0, %s117
      %s132 = sphi 0, %s118
      %s136 = sphi 0, %s136
      %s138 = sphi 0, %s136
      %s139 = sphi 0, %s138
      %s153 = sphi 0, %s139
      %s157 = sphi 0, %s157
      %s159 = sphi 0, %s157
      %s160 = sphi 0, %s159
      %s174 = sphi 0, %s160
      %s180 = sphi 0, %s182
      %s183 = sphi 0, %s180
      %s184 = sphi 0, %s183
      %s200 = sphi 0, %s184
    $region4: #{tpu_custom_call.1} parent=1 // loop_header_branch
      %21 = sbr.rel (%p19) target = $region8
    $region5: #{tpu_custom_call.1} parent=1 // loop_body
      %s23 = ssub.s32 %s18, 1
      %s24 = ssub.s32 %s18, 2
      %s25 = sadd.s32 %s18, 1
      %s26 = ssub.s32 %s18, %s25
      %p27 = scmp.eq.s32.totalorder %s26, 0
      %s29 = sadd.s32 %s28, 1
      %s30 = scalar_select %p27, %s28, %s29
      %p33 = pneg %p27
      %p34 = scmp.eq.s32.totalorder %s18, 3
      %p35 = por %p33, %p34
      %p36 = scmp.ne.s32.totalorder %s28, %s31
      %p37 = scmp.eq.s32.totalorder %s18, 0
      %p38 = por %p36, %p37
      %p39 = scmp.ne.s32.totalorder %s28, %s31
      %p40 = scmp.eq.s32.totalorder %s23, 3
      %p41 = por %p39, %p40
      %p42 = scmp.ne.s32.totalorder %s31, %s32
      %p43 = scmp.eq.s32.totalorder %s23, 0
      %p44 = por %p42, %p43
      %p45 = scmp.ne.s32.totalorder %s31, %s32
      %p46 = scmp.eq.s32.totalorder %s24, 3
      %p47 = por %p45, %p46
      %p49 = scmp.ne.s32.totalorder %s32, %s48
      %p50 = scmp.eq.s32.totalorder %s24, 0
      %p51 = por %p49, %p50
      %s53 = sadd.s32 %s52, 1
      %p56 = scmp.eq.s32.totalorder %s18, 3
      %p57 = scmp.ne.s32.totalorder %s52, %s54
      %p58 = scmp.eq.s32.totalorder %s18, 0
      %p59 = por %p57, %p58
      %p60 = scmp.ne.s32.totalorder %s52, %s54
      %p61 = scmp.eq.s32.totalorder %s23, 3
      %p62 = por %p60, %p61
      %p63 = scmp.ne.s32.totalorder %s54, %s55
      %p64 = scmp.eq.s32.totalorder %s23, 0
      %p65 = por %p63, %p64
      %p66 = scmp.ne.s32.totalorder %s54, %s55
      %p67 = scmp.eq.s32.totalorder %s24, 3
      %p68 = por %p66, %p67
      %p70 = scmp.ne.s32.totalorder %s55, %s69
      %p71 = scmp.eq.s32.totalorder %s24, 0
      %p72 = por %p70, %p71
      %s74 = sadd.s32 %s73, 1
      %p77 = scmp.eq.s32.totalorder %s18, 3
      %p78 = scmp.ne.s32.totalorder %s73, %s75
      %p79 = scmp.eq.s32.totalorder %s18, 0
      %p80 = por %p78, %p79
      %p81 = scmp.ne.s32.totalorder %s73, %s75
      %p82 = scmp.eq.s32.totalorder %s23, 3
      %p83 = por %p81, %p82
      %p84 = scmp.ne.s32.totalorder %s75, %s76
      %p85 = scmp.eq.s32.totalorder %s23, 0
      %p86 = por %p84, %p85
      %p87 = scmp.ne.s32.totalorder %s75, %s76
      %p88 = scmp.eq.s32.totalorder %s24, 3
      %p89 = por %p87, %p88
      %p91 = scmp.ne.s32.totalorder %s76, %s90
      %p92 = scmp.eq.s32.totalorder %s24, 0
      %p93 = por %p91, %p92
      %s95 = sadd.s32 %s94, 1
      %p98 = scmp.eq.s32.totalorder %s18, 3
      %p99 = scmp.ne.s32.totalorder %s94, %s96
      %p100 = scmp.eq.s32.totalorder %s18, 0
      %p101 = por %p99, %p100
      %p102 = scmp.ne.s32.totalorder %s94, %s96
      %p103 = scmp.eq.s32.totalorder %s23, 3
      %p104 = por %p102, %p103
      %p105 = scmp.ne.s32.totalorder %s96, %s97
      %p106 = scmp.eq.s32.totalorder %s23, 0
      %p107 = por %p105, %p106
      %p108 = scmp.ne.s32.totalorder %s96, %s97
      %p109 = scmp.eq.s32.totalorder %s24, 3
      %p110 = por %p108, %p109
      %p112 = scmp.ne.s32.totalorder %s97, %s111
      %p113 = scmp.eq.s32.totalorder %s24, 0
      %p114 = por %p112, %p113
      %s116 = sadd.s32 %s115, 1
      %p119 = scmp.eq.s32.totalorder %s18, 3
      %p120 = scmp.ne.s32.totalorder %s115, %s117
      %p121 = scmp.eq.s32.totalorder %s18, 0
      %p122 = por %p120, %p121
      %p123 = scmp.ne.s32.totalorder %s115, %s117
      %p124 = scmp.eq.s32.totalorder %s23, 3
      %p125 = por %p123, %p124
      %p126 = scmp.ne.s32.totalorder %s117, %s118
      %p127 = scmp.eq.s32.totalorder %s23, 0
      %p128 = por %p126, %p127
      %p129 = scmp.ne.s32.totalorder %s117, %s118
      %p130 = scmp.eq.s32.totalorder %s24, 3
      %p131 = por %p129, %p130
      %p133 = scmp.ne.s32.totalorder %s118, %s132
      %p134 = scmp.eq.s32.totalorder %s24, 0
      %p135 = por %p133, %p134
      %s137 = sadd.s32 %s136, 1
      %p140 = scmp.eq.s32.totalorder %s18, 3
      %p141 = scmp.ne.s32.totalorder %s136, %s138
      %p142 = scmp.eq.s32.totalorder %s18, 0
      %p143 = por %p141, %p142
      %p144 = scmp.ne.s32.totalorder %s136, %s138
      %p145 = scmp.eq.s32.totalorder %s23, 3
      %p146 = por %p144, %p145
      %p147 = scmp.ne.s32.totalorder %s138, %s139
      %p148 = scmp.eq.s32.totalorder %s23, 0
      %p149 = por %p147, %p148
      %p150 = scmp.ne.s32.totalorder %s138, %s139
      %p151 = scmp.eq.s32.totalorder %s24, 3
      %p152 = por %p150, %p151
      %p154 = scmp.ne.s32.totalorder %s139, %s153
      %p155 = scmp.eq.s32.totalorder %s24, 0
      %p156 = por %p154, %p155
      %s158 = sadd.s32 %s157, 1
      %p161 = scmp.eq.s32.totalorder %s18, 3
      %p162 = scmp.ne.s32.totalorder %s157, %s159
      %p163 = scmp.eq.s32.totalorder %s18, 0
      %p164 = por %p162, %p163
      %p165 = scmp.ne.s32.totalorder %s157, %s159
      %p166 = scmp.eq.s32.totalorder %s23, 3
      %p167 = por %p165, %p166
      %p168 = scmp.ne.s32.totalorder %s159, %s160
      %p169 = scmp.eq.s32.totalorder %s23, 0
      %p170 = por %p168, %p169
      %p171 = scmp.ne.s32.totalorder %s159, %s160
      %p172 = scmp.eq.s32.totalorder %s24, 3
      %p173 = por %p171, %p172
      %p175 = scmp.ne.s32.totalorder %s160, %s174
      %p176 = scmp.eq.s32.totalorder %s24, 0
      %p177 = por %p175, %p176
      %s178 = ssub.s32 %s18, %s25
      %p179 = scmp.eq.s32.totalorder %s178, 0
      %s181 = sadd.s32 %s180, 1
      %s182 = scalar_select %p179, %s180, %s181
      %p185 = pneg %p179
      %p186 = scmp.eq.s32.totalorder %s18, 3
      %p187 = por %p185, %p186
      %p188 = scmp.ne.s32.totalorder %s180, %s183
      %p189 = scmp.eq.s32.totalorder %s18, 0
      %p190 = por %p188, %p189
      %p191 = scmp.ne.s32.totalorder %s180, %s183
      %p192 = scmp.eq.s32.totalorder %s23, 3
      %p193 = por %p191, %p192
      %p194 = scmp.ne.s32.totalorder %s183, %s184
      %p195 = scmp.eq.s32.totalorder %s23, 0
      %p196 = por %p194, %p195
      %p197 = scmp.ne.s32.totalorder %s183, %s184
      %p198 = scmp.eq.s32.totalorder %s24, 3
      %p199 = por %p197, %p198
      %p201 = scmp.ne.s32.totalorder %s184, %s200
      %p202 = scmp.eq.s32.totalorder %s24, 0
      %p203 = por %p201, %p202
      %p204 = scmp.le.s32.totalorder 1, %s18
      %p205 = scmp.lt.s32.totalorder %s18, 5
      %p206 = pnand %p204, %p205
      %p207 = pneg %p206
      // Predicated region
      $region9: #{tpu_custom_call.1} parent=5 // pred_check
        _
      $region10: #{tpu_custom_call.1} parent=5 // pred_check_branch
        %209 = sbr.rel (%p206) target = $region12
      $region11: #{tpu_custom_call.1} parent=5 // pred_region
        %s210 = ssub.s32 %s18, 1
        // Predicated region
        $region13: #{tpu_custom_call.1} parent=11 // pred_check
          %p211 = pneg %p65
        $region14: #{tpu_custom_call.1} parent=11 // pred_check_branch
          %213 = sbr.rel (%p211) target = $region16
        $region15: #{tpu_custom_call.1} parent=11 // pred_region
          _
        $region16: #{tpu_custom_call.1} parent=11 // pred_fallthru
          _
        // Predicated region
        $region17: #{tpu_custom_call.1} parent=11 // pred_check
          %p214 = pneg %p86
        $region18: #{tpu_custom_call.1} parent=11 // pred_check_branch
          %216 = sbr.rel (%p214) target = $region20
        $region19: #{tpu_custom_call.1} parent=11 // pred_region
          _
        $region20: #{tpu_custom_call.1} parent=11 // pred_fallthru
          _
        // Predicated region
        $region21: #{tpu_custom_call.1} parent=11 // pred_check
          %p217 = pneg %p107
        $region22: #{tpu_custom_call.1} parent=11 // pred_check_branch
          %219 = sbr.rel (%p217) target = $region24
        $region23: #{tpu_custom_call.1} parent=11 // pred_region
          %s221 = ssub.s32 1024, 1024
          %222 = vsyncadd [#allocation3], %s221
          %s223 = sshll.u32 [#allocation2], 4
          %s224 = int_to_ptr.vmem [resolvable:$true] %s223
          %229 = dma.hbm_to_vmem [thread:$0]  %s3, 1024, %s224, [#allocation3], 64, 64, 4
        $region24: #{tpu_custom_call.1} parent=11 // pred_fallthru
          _
        // Predicated region
        $region25: #{tpu_custom_call.1} parent=11 // pred_check
          %p230 = pneg %p128
        $region26: #{tpu_custom_call.1} parent=11 // pred_check_branch
          %232 = sbr.rel (%p230) target = $region28
        $region27: #{tpu_custom_call.1} parent=11 // pred_region
          _
        $region28: #{tpu_custom_call.1} parent=11 // pred_fallthru
          _
        // Predicated region
        $region29: #{tpu_custom_call.1} parent=11 // pred_check
          %p233 = pneg %p149
        $region30: #{tpu_custom_call.1} parent=11 // pred_check_branch
          %235 = sbr.rel (%p233) target = $region32
        $region31: #{tpu_custom_call.1} parent=11 // pred_region
          %s237 = ssub.s32 1024, 1024
          %238 = vsyncadd [#allocation6], %s237
          %s239 = sshll.u32 [#allocation5], 4
          %s240 = int_to_ptr.vmem [resolvable:$true] %s239
          %245 = dma.hbm_to_vmem [thread:$0]  %s5, 1024, %s240, [#allocation6], 64, 64, 4
        $region32: #{tpu_custom_call.1} parent=11 // pred_fallthru
          _
        // Predicated region
        $region33: #{tpu_custom_call.1} parent=11 // pred_check
          %p246 = pneg %p170
        $region34: #{tpu_custom_call.1} parent=11 // pred_check_branch
          %248 = sbr.rel (%p246) target = $region36
        $region35: #{tpu_custom_call.1} parent=11 // pred_region
          _
        $region36: #{tpu_custom_call.1} parent=11 // pred_fallthru
          _
      $region12: #{tpu_custom_call.1} parent=5 // pred_fallthru
        _
      %p249 = scmp.lt.s32.totalorder %s18, 4
      // Predicated region
      $region37: #{tpu_custom_call.1} parent=5 // pred_check
        %p250 = pneg %p249
      $region38: #{tpu_custom_call.1} parent=5 // pred_check_branch
        %252 = sbr.rel (%p250) target = $region40
      $region39: #{tpu_custom_call.1} parent=5 // pred_region
        // Predicated region
        $region41: #{tpu_custom_call.1} parent=39 // pred_check
          %p253 = pneg %p38
        $region42: #{tpu_custom_call.1} parent=39 // pred_check_branch
          %255 = sbr.rel (%p253) target = $region44
        $region43: #{tpu_custom_call.1} parent=39 // pred_region
          %s256 = smul.u32 2, %s18
          %p257 = scmp.lt.s32.totalorder %s256, 7
          %s258 = scalar_select %p257, %s256, 7
          %s259 = smul.addr %s258, 4
          %s260 = scalar_lea.vmem %s0, %s259
          %s261 = smul.u32 2, %s18
        $region44: #{tpu_custom_call.1} parent=39 // pred_fallthru
          _
      $region40: #{tpu_custom_call.1} parent=5 // pred_fallthru
        _
      %p262 = scmp.le.s32.totalorder 1, %s18
      %p263 = scmp.lt.s32.totalorder %s18, 5
      %p264 = pnand %p262, %p263
      %p265 = pneg %p264
      // Predicated region
      $region45: #{tpu_custom_call.1} parent=5 // pred_check
        _
      $region46: #{tpu_custom_call.1} parent=5 // pred_check_branch
        %267 = sbr.rel (%p264) target = $region48
      $region47: #{tpu_custom_call.1} parent=5 // pred_region
        %s268 = ssub.s32 %s18, 1
        // Predicated region
        $region49: #{tpu_custom_call.1} parent=47 // pred_check
          %p269 = pneg %p107
        $region50: #{tpu_custom_call.1} parent=47 // pred_check_branch
          %271 = sbr.rel (%p269) target = $region52
        $region51: #{tpu_custom_call.1} parent=47 // pred_region
          %272 = dma.done [#allocation3], 1024
        $region52: #{tpu_custom_call.1} parent=47 // pred_fallthru
          _
        // Predicated region
        $region53: #{tpu_custom_call.1} parent=47 // pred_check
          %p273 = pneg %p149
        $region54: #{tpu_custom_call.1} parent=47 // pred_check_branch
          %275 = sbr.rel (%p273) target = $region56
        $region55: #{tpu_custom_call.1} parent=47 // pred_region
          %276 = dma.done [#allocation6], 1024
        $region56: #{tpu_custom_call.1} parent=47 // pred_fallthru
          _
        %s277 = smul.u32 2, %s23
        %p278 = scmp.lt.s32.totalorder %s277, 7
        %s279 = scalar_select %p278, %s277, 7
        %s280 = smul.addr %s279, 4
        %s281 = scalar_lea.vmem %s0, %s280
        %p282 = pneg %p44
        %p283 = pneg %p41
        %p284 = pneg %p65
        %p285 = pneg %p62
        %p286 = pneg %p86
        %p287 = pneg %p83
        %p288 = pneg %p107
        %p289 = pneg %p104
        %p290 = pneg %p128
        %p291 = pneg %p125
        %p292 = pneg %p149
        %p293 = pneg %p146
        %p294 = pneg %p170
        %p295 = pneg %p167
        %p296 = pneg %p196
        %p297 = pneg %p193
        %s298 = sand.u32 %s183, 1
        %s299 = scalar_lea.sflag [#allocation4], %s298
        %s300 = sand.u32 %s183, 1
        %s301 = smul.addr %s300, 16
        %s302 = scalar_lea.vmem [#allocation7], %s301
        %s303 = smul.u32 2, %s23
        %p304 = scmp.lt.s32.totalorder %s303, 7
        %s305 = scalar_select %p304, %s303, 7
        %s306 = smul.addr %s305, 4
        %s307 = scalar_lea.vmem %s0, %s306
        %s308 = smul.u32 2, %s23
        %s309 = smul.u32 2, %s23
        %v311 = vld [vmem:[%s307] sm:$0xf]
        %v312 = vld [vmem:[%s307 + $0x4] sm:$0xf]
        %v313 = vld [vmem:[%s1] sm:$0x3]
        %v314 = vld [vmem:[%s2] sm:$0x1]
        %v316 = vlaneseq
        %v317 = vshrl.u32 %v316, 7
        %v318 = vsub.s32 0, %v317
        %v319 = vrot.slane %v314, %v318
        %v323 = vunpack.c.l.b16 %v311
        %v324 = vunpack.c.l.b16 %v312
        %v325 = vpack.c.b16 %v324, %v323
        %vm326 = vcmask 31744
        %v328 = vsel %vm326, %v325, 0
        %vm330 = vcmask 1041408
        %v332 = vsel %vm330, %v313, 0
        %334 = vmatprep.subr.bf16.mxu0 0
        %335 = vmatpush1.bf16.msra.mxu0 %v332
        %336 = vmatprep.subr.bf16.mxu0 0
        %337 = vmatpush1.bf16.msra.mxu0 0
        %338 = vmatprep.subr.bf16.mxu0 0
        %339 = vmatpush1.bf16.msra.mxu0 0
        %340 = vmatprep.subr.bf16.mxu0 0
        %341 = vmatpush1.bf16.msra.mxu0 0
        %342 = vmatprep.subr.bf16.mxu0 0
        %343 = vmatpush1.bf16.msra.mxu0 0
        %344 = vmatprep.subr.bf16.mxu0 0
        %345 = vmatpush1.bf16.msra.mxu0 0
        %346 = vmatprep.subr.bf16.mxu0 0
        %347 = vmatpush1.bf16.msra.mxu0 0
        %348 = vmatprep.subr.bf16.mxu0 0
        %349 = vmatpush1.bf16.msra.mxu0 0
        %350 = vmatprep.subr.bf16.mxu0 0
        %351 = vmatpush1.bf16.msra.mxu0 0
        %352 = vmatprep.subr.bf16.mxu0 0
        %353 = vmatpush1.bf16.msra.mxu0 0
        %354 = vmatprep.subr.bf16.mxu0 0
        %355 = vmatpush1.bf16.msra.mxu0 0
        %356 = vmatprep.subr.bf16.mxu0 0
        %357 = vmatpush1.bf16.msra.mxu0 0
        %358 = vmatprep.subr.bf16.mxu0 0
        %359 = vmatpush1.bf16.msra.mxu0 0
        %360 = vmatprep.subr.bf16.mxu0 0
        %361 = vmatpush1.bf16.msra.mxu0 0
        %362 = vmatprep.subr.bf16.mxu0 0
        %363 = vmatpush1.bf16.msra.mxu0 0
        %364 = vmatprep.subr.bf16.mxu0 0
        %365 = vmatpush1.bf16.msra.mxu0 0
        %366 = vmatprep.mubr.bf16.mxu0 0
        %367 = vmatmul.mubr.bf16.gmra.mrb[0].mxu0 %v328
        %v368 = vpop.f32.mrb[0].mxu0
        %v369 = vadd.f32 %v319, %v368
        %v370 = vpop.f32.mrb[0].mxu0
        %v371 = vpop.f32.mrb[0].mxu0
        %v372 = vadd.f32 %v319, %v371
        %v373 = vpop.f32.mrb[0].mxu0
        %374 = vdwg.mxu0
        %v375 = vmax.f32 %v369, 0.0
        %v376 = vmax.f32 %v372, 0.0
        %v377 = vpack.c.bf16 %v376, %v375
        %v378 = vld [vmem:[#allocation2] sm:$0xf]
        %v379 = vld [vmem:[#allocation2 + $0x4] sm:$0xf]
        %v380 = vld [vmem:[#allocation2 + $0x8] sm:$0xf]
        %v381 = vld [vmem:[#allocation2 + $0xc] sm:$0xf]
        %v382 = vld [vmem:[#allocation2 + $0x10] sm:$0xf]
        %v383 = vld [vmem:[#allocation2 + $0x14] sm:$0xf]
        %v384 = vld [vmem:[#allocation2 + $0x18] sm:$0xf]
        %v385 = vld [vmem:[#allocation2 + $0x1c] sm:$0xf]
        %v386 = vld [vmem:[#allocation2 + $0x20] sm:$0xf]
        %v387 = vld [vmem:[#allocation2 + $0x24] sm:$0xf]
        %v388 = vld [vmem:[#allocation2 + $0x28] sm:$0xf]
        %v389 = vld [vmem:[#allocation2 + $0x2c] sm:$0xf]
        %v390 = vld [vmem:[#allocation2 + $0x30] sm:$0xf]
        %v391 = vld [vmem:[#allocation2 + $0x34] sm:$0xf]
        %v392 = vld [vmem:[#allocation2 + $0x38] sm:$0xf]
        %v393 = vld [vmem:[#allocation2 + $0x3c] sm:$0xf]
        %v394 = vld [vmem:[%s4] sm:$0x1]
        %v396 = vlaneseq
        %v397 = vshrl.u32 %v396, 7
        %v398 = vsub.s32 0, %v397
        %v399 = vrot.slane %v394, %v398
        %v417 = vunpack.c.l.b16 %v378
        %v418 = vunpack.c.l.b16 %v379
        %v419 = vunpack.c.l.b16 %v380
        %v420 = vunpack.c.l.b16 %v381
        %v421 = vunpack.c.l.b16 %v382
        %v422 = vunpack.c.l.b16 %v383
        %v423 = vunpack.c.l.b16 %v384
        %v424 = vunpack.c.l.b16 %v385
        %v425 = vunpack.c.l.b16 %v386
        %v426 = vunpack.c.l.b16 %v387
        %v427 = vunpack.c.l.b16 %v388
        %v428 = vunpack.c.l.b16 %v389
        %v429 = vunpack.c.l.b16 %v390
        %v430 = vunpack.c.l.b16 %v391
        %v431 = vunpack.c.l.b16 %v392
        %v432 = vunpack.c.l.b16 %v393
        %v433 = vpack.c.b16 %v418, %v417
        %v434 = vpack.c.b16 %v420, %v419
        %v435 = vpack.c.b16 %v422, %v421
        %v436 = vpack.c.b16 %v424, %v423
        %v437 = vpack.c.b16 %v426, %v425
        %v438 = vpack.c.b16 %v428, %v427
        %v439 = vpack.c.b16 %v430, %v429
        %v440 = vpack.c.b16 %v432, %v431
        %449 = vmatprep.subr.bf16.mxu0 0
        %450 = vmatpush1.bf16.msra.mxu0 %v433
        %451 = vmatprep.subr.bf16.mxu0 0
        %452 = vmatpush1.bf16.msra.mxu0 %v434
        %453 = vmatprep.subr.bf16.mxu0 0
        %454 = vmatpush1.bf16.msra.mxu0 %v435
        %455 = vmatprep.subr.bf16.mxu0 0
        %456 = vmatpush1.bf16.msra.mxu0 %v436
        %457 = vmatprep.subr.bf16.mxu0 0
        %458 = vmatpush1.bf16.msra.mxu0 %v437
        %459 = vmatprep.subr.bf16.mxu0 0
        %460 = vmatpush1.bf16.msra.mxu0 %v438
        %461 = vmatprep.subr.bf16.mxu0 0
        %462 = vmatpush1.bf16.msra.mxu0 %v439
        %463 = vmatprep.subr.bf16.mxu0 0
        %464 = vmatpush1.bf16.msra.mxu0 %v440
        %465 = vmatprep.subr.bf16.mxu0 0
        %466 = vmatpush1.bf16.msra.mxu0 0
        %467 = vmatprep.subr.bf16.mxu0 0
        %468 = vmatpush1.bf16.msra.mxu0 0
        %469 = vmatprep.subr.bf16.mxu0 0
        %470 = vmatpush1.bf16.msra.mxu0 0
        %471 = vmatprep.subr.bf16.mxu0 0
        %472 = vmatpush1.bf16.msra.mxu0 0
        %473 = vmatprep.subr.bf16.mxu0 0
        %474 = vmatpush1.bf16.msra.mxu0 0
        %475 = vmatprep.subr.bf16.mxu0 0
        %476 = vmatpush1.bf16.msra.mxu0 0
        %477 = vmatprep.subr.bf16.mxu0 0
        %478 = vmatpush1.bf16.msra.mxu0 0
        %479 = vmatprep.subr.bf16.mxu0 0
        %480 = vmatpush1.bf16.msra.mxu0 0
        %481 = vmatprep.mubr.bf16.mxu0 0
        %482 = vmatmul.mubr.bf16.gmra.mrb[0].mxu0 %v377
        %v483 = vpop.f32.mrb[0].mxu0
        %v484 = vadd.f32 %v399, %v483
        %v485 = vpop.f32.mrb[0].mxu0
        %v486 = vpop.f32.mrb[0].mxu0
        %v487 = vadd.f32 %v399, %v486
        %v488 = vpop.f32.mrb[0].mxu0
        %489 = vdwg.mxu0
        %v490 = vmax.f32 %v484, 0.0
        %v491 = vmax.f32 %v487, 0.0
        %v492 = vpack.c.bf16 %v491, %v490
        %v493 = vld [vmem:[#allocation5] sm:$0xf]
        %v494 = vld [vmem:[#allocation5 + $0x4] sm:$0xf]
        %v495 = vld [vmem:[#allocation5 + $0x8] sm:$0xf]
        %v496 = vld [vmem:[#allocation5 + $0xc] sm:$0xf]
        %v497 = vld [vmem:[#allocation5 + $0x10] sm:$0xf]
        %v498 = vld [vmem:[#allocation5 + $0x14] sm:$0xf]
        %v499 = vld [vmem:[#allocation5 + $0x18] sm:$0xf]
        %v500 = vld [vmem:[#allocation5 + $0x1c] sm:$0xf]
        %v501 = vld [vmem:[#allocation5 + $0x20] sm:$0xf]
        %v502 = vld [vmem:[#allocation5 + $0x24] sm:$0xf]
        %v503 = vld [vmem:[#allocation5 + $0x28] sm:$0xf]
        %v504 = vld [vmem:[#allocation5 + $0x2c] sm:$0xf]
        %v505 = vld [vmem:[#allocation5 + $0x30] sm:$0xf]
        %v506 = vld [vmem:[#allocation5 + $0x34] sm:$0xf]
        %v507 = vld [vmem:[#allocation5 + $0x38] sm:$0xf]
        %v508 = vld [vmem:[#allocation5 + $0x3c] sm:$0xf]
        %v509 = vld [vmem:[%s6] sm:$0x1]
        %v511 = vlaneseq
        %v512 = vshrl.u32 %v511, 7
        %v513 = vsub.s32 0, %v512
        %v514 = vrot.slane %v509, %v513
        %v532 = vunpack.c.l.b16 %v493
        %v533 = vunpack.c.l.b16 %v494
        %v534 = vunpack.c.l.b16 %v495
        %v535 = vunpack.c.l.b16 %v496
        %v536 = vunpack.c.l.b16 %v497
        %v537 = vunpack.c.l.b16 %v498
        %v538 = vunpack.c.l.b16 %v499
        %v539 = vunpack.c.l.b16 %v500
        %v540 = vunpack.c.l.b16 %v501
        %v541 = vunpack.c.l.b16 %v502
        %v542 = vunpack.c.l.b16 %v503
        %v543 = vunpack.c.l.b16 %v504
        %v544 = vunpack.c.l.b16 %v505
        %v545 = vunpack.c.l.b16 %v506
        %v546 = vunpack.c.l.b16 %v507
        %v547 = vunpack.c.l.b16 %v508
        %v548 = vpack.c.b16 %v533, %v532
        %v549 = vpack.c.b16 %v535, %v534
        %v550 = vpack.c.b16 %v537, %v536
        %v551 = vpack.c.b16 %v539, %v538
        %v552 = vpack.c.b16 %v541, %v540
        %v553 = vpack.c.b16 %v543, %v542
        %v554 = vpack.c.b16 %v545, %v544
        %v555 = vpack.c.b16 %v547, %v546
        %564 = vmatprep.subr.bf16.mxu0 0
        %565 = vmatpush1.bf16.msra.mxu0 %v548
        %566 = vmatprep.subr.bf16.mxu0 0
        %567 = vmatpush1.bf16.msra.mxu0 %v549
        %568 = vmatprep.subr.bf16.mxu0 0
        %569 = vmatpush1.bf16.msra.mxu0 %v550
        %570 = vmatprep.subr.bf16.mxu0 0
        %571 = vmatpush1.bf16.msra.mxu0 %v551
        %572 = vmatprep.subr.bf16.mxu0 0
        %573 = vmatpush1.bf16.msra.mxu0 %v552
        %574 = vmatprep.subr.bf16.mxu0 0
        %575 = vmatpush1.bf16.msra.mxu0 %v553
        %576 = vmatprep.subr.bf16.mxu0 0
        %577 = vmatpush1.bf16.msra.mxu0 %v554
        %578 = vmatprep.subr.bf16.mxu0 0
        %579 = vmatpush1.bf16.msra.mxu0 %v555
        %580 = vmatprep.subr.bf16.mxu0 0
        %581 = vmatpush1.bf16.msra.mxu0 0
        %582 = vmatprep.subr.bf16.mxu0 0
        %583 = vmatpush1.bf16.msra.mxu0 0
        %584 = vmatprep.subr.bf16.mxu0 0
        %585 = vmatpush1.bf16.msra.mxu0 0
        %586 = vmatprep.subr.bf16.mxu0 0
        %587 = vmatpush1.bf16.msra.mxu0 0
        %588 = vmatprep.subr.bf16.mxu0 0
        %589 = vmatpush1.bf16.msra.mxu0 0
        %590 = vmatprep.subr.bf16.mxu0 0
        %591 = vmatpush1.bf16.msra.mxu0 0
        %592 = vmatprep.subr.bf16.mxu0 0
        %593 = vmatpush1.bf16.msra.mxu0 0
        %594 = vmatprep.subr.bf16.mxu0 0
        %595 = vmatpush1.bf16.msra.mxu0 0
        %596 = vmatprep.mubr.bf16.mxu0 0
        %597 = vmatmul.mubr.bf16.gmra.mrb[0].mxu0 %v492
        %v598 = vpop.f32.mrb[0].mxu0
        %v599 = vadd.f32 %v514, %v598
        %v600 = vpop.f32.mrb[0].mxu0
        %v601 = vpop.f32.mrb[0].mxu0
        %v602 = vadd.f32 %v514, %v601
        %v603 = vpop.f32.mrb[0].mxu0
        %604 = vdwg.mxu0
        %v605 = vlaneseq
        %v606 = vand.u32 %v605, 127
        %vm607 = vcmp.lt.s32.totalorder %v606, 10
        %v608 = vsel %vm607, %v599, -1e+30
        %v609 = vsel %vm607, %v602, -1e+30
        %610 = vmax.xlane.f32.xlu0 %v608
        %v611 = vpop.xlane.xlu0 %610
        %612 = vmax.xlane.f32.xlu0 %v609
        %v613 = vpop.xlane.xlu0 %612
        %v614 = vsub.f32 %v608, %v611
        %v615 = vsub.f32 %v609, %v613
        %v616 = vmul.f32 %v614, 1.442695
        %v617 = vpow.pop %v616
        %v618 = vmul.f32 %v615, 1.442695
        %v619 = vpow.pop %v618
        %620 = vadd.xlane.f32.xlu0 %v617
        %v621 = vpop.xlane.xlu0 %620
        %622 = vadd.xlane.f32.xlu0 %v619
        %v623 = vpop.xlane.xlu0 %622
        %v624 = vrcp.pop %v621
        %v625 = vmul.f32 %v617, %v624
        %v626 = vrcp.pop %v623
        %v627 = vmul.f32 %v619, %v626
        %628 = vst [vmem:[%s302] sm:$0xff] %v625
        %629 = vst [vmem:[%s302 + $0x8] sm:$0xff] %v627
        %s630 = sand.u32 %s183, 1
        %s631 = scalar_lea.sflag [#allocation4], %s630
        %s632 = sand.u32 %s183, 1
        %s633 = smul.addr %s632, 16
        %s634 = scalar_lea.vmem [#allocation7], %s633
        // Predicated region
        $region57: #{tpu_custom_call.1} parent=47 // pred_check
          %p635 = pneg %p193
        $region58: #{tpu_custom_call.1} parent=47 // pred_check_branch
          %637 = sbr.rel (%p635) target = $region60
        $region59: #{tpu_custom_call.1} parent=47 // pred_region
          %s638 = smul.u32 2, %s23
          %s640 = ssub.s32 256, 256
          %641 = vsyncadd %s631, %s640
          %s642 = smul.addr %s638, 128
          %s643 = scalar_lea.hbm %s7, %s642
          %s644 = sshll.u32 %s634, 4
          %s645 = int_to_ptr.vmem [resolvable:$true] %s644
          %650 = dma.vmem_to_hbm [thread:$0]  %s645, 256, %s643, %s631, 128, 128, 8
        $region60: #{tpu_custom_call.1} parent=47 // pred_fallthru
          _
      $region48: #{tpu_custom_call.1} parent=5 // pred_fallthru
        _
      %p651 = scmp.le.s32.totalorder 2, %s18
      // Predicated region
      $region61: #{tpu_custom_call.1} parent=5 // pred_check
        %p652 = pneg %p651
      $region62: #{tpu_custom_call.1} parent=5 // pred_check_branch
        %654 = sbr.rel (%p652) target = $region64
      $region63: #{tpu_custom_call.1} parent=5 // pred_region
        %s655 = ssub.s32 %s18, 2
        // Predicated region
        $region65: #{tpu_custom_call.1} parent=63 // pred_check
          %p656 = pneg %p199
        $region66: #{tpu_custom_call.1} parent=63 // pred_check_branch
          %658 = sbr.rel (%p656) target = $region68
        $region67: #{tpu_custom_call.1} parent=63 // pred_region
          %s659 = sand.u32 %s184, 1
          %s660 = scalar_lea.sflag [#allocation4], %s659
          %s661 = sand.u32 %s184, 1
          %s662 = smul.addr %s661, 16
          %s663 = scalar_lea.vmem [#allocation7], %s662
          %664 = dma.done %s660, 256
        $region68: #{tpu_custom_call.1} parent=63 // pred_fallthru
          _
      $region64: #{tpu_custom_call.1} parent=5 // pred_fallthru
        _
    $region6: #{tpu_custom_call.1} parent=1 // loop_footer
      %s22 = sadd.s32 1, %s18
    $region7: #{tpu_custom_call.1} parent=1 // loop_footer_branch
      %17 = sbr.rel target = $region3
    $region8: #{tpu_custom_call.1} parent=1 // loop_exit
      _
    %665 = vsyncpa [#allocation3], 1
    %s666 = scalar_lea.sflag [#allocation3], 1
    %667 = vsyncpa %s666, 1
    %668 = vsyncpa [#allocation6], 1
    %669 = vsyncpa [#allocation4], 1
    %s670 = scalar_lea.sflag [#allocation4], 1
    %671 = vsyncpa %s670, 1

</llo_original>
